<compile_context>
chip_gen: v7x
topology: tpu7x:2x2x1
jax: 0.10.0
libtpu: 0.0.40
codegen_flags: <defaults>
</compile_context>

<pallas_src>
import functools

import jax
import jax.numpy as jnp
from jax import lax
from jax.experimental import pallas as pl
from jax.experimental.pallas import tpu as pltpu


# --------------------------------------------------------------------------- #
# Kernel 1: fused-over-heads Q/K/V projection (lane-dense outputs)
# --------------------------------------------------------------------------- #
def _qkv_proj_kernel(x_ref, wq_ref, wk_ref, wv_ref, bq_ref, bk_ref, bv_ref,
                     q_ref, k_ref, v_ref):
    """x_ref: (ts, E) bf16; w*: (E, N*H) bf16; b*: (1, N*H) f32.
    Outputs q/k/v: (ts, N*H) bf16, lane-dense (unmasked vector stores).
    W_Q / b_Q already carry the 1/sqrt(d_head) scale (folded on the host)."""
    x = x_ref[...]                                            # (ts, E) bf16
    for w_ref, b_ref, o_ref in ((wq_ref, bq_ref, q_ref),
                                (wk_ref, bk_ref, k_ref),
                                (wv_ref, bv_ref, v_ref)):
        y = jnp.dot(x, w_ref[...], preferred_element_type=jnp.float32)
        o_ref[...] = (y + b_ref[...]).astype(o_ref.dtype)     # (ts, N*H)


# --------------------------------------------------------------------------- #
# Kernel 2: flash attention (online softmax over kv tiles) + fused W_O
# --------------------------------------------------------------------------- #
def _flash_attn_kernel(q_ref, k_ref, v_ref, wo_ref, bo_ref, o_ref,
                       m_sc, l_sc, acc_sc, *, n_heads, d_head, exp_dtype):
    """q_ref: (tq, N*H) bf16; k/v_ref: (tk, N*H) bf16; wo_ref: (N*H, E) bf16;
    bo_ref: (1, E) f32; o_ref: (tq, E) f32.
    Scratch: m/l (N, tq, 1) f32, acc (N, tq, H) f32."""
    tq = q_ref.shape[0]
    tk = k_ref.shape[0]
    qi = pl.program_id(1)
    ki = pl.program_id(2)

    @pl.when(ki == 0)
    def _init():
        m_sc[...] = jnp.full_like(m_sc, -jnp.inf)
        l_sc[...] = jnp.zeros_like(l_sc)
        acc_sc[...] = jnp.zeros_like(acc_sc)

    def head_slice(a, n):
        return a[:, n * d_head:(n + 1) * d_head]              # static lane slice

    def process_block(apply_mask):
        q = q_ref[...]                                        # (tq, NH) bf16
        k = k_ref[...]                                        # (tk, NH) bf16
        # Per-head scores (contraction over d_head) straight from lane slices.
        s = jnp.stack([
            lax.dot_general(head_slice(q, n), head_slice(k, n),
                            (((1,), (1,)), ((), ())),
                            preferred_element_type=jnp.float32)
            for n in range(n_heads)])                         # (N, tq, tk) f32

        if apply_mask:  # only for blocks straddling the causal diagonal
            q_pos = qi * tq + lax.broadcasted_iota(jnp.int32, (1, tq, tk), 1)
            k_pos = ki * tk + lax.broadcasted_iota(jnp.int32, (1, tq, tk), 2)
            s = jnp.where(k_pos <= q_pos, s, -1.0e9)

        m_prev = m_sc[...]
        m_new = jnp.maximum(m_prev, jnp.max(s, axis=-1, keepdims=True))
        alpha = jnp.exp(m_prev - m_new)                       # (N, tq, 1) f32
        # exp in bf16 (v6e/v7x EUP); keep the row-sum accumulation in f32.
        p = jnp.exp((s - m_new).astype(exp_dtype))            # (N, tq, tk)
        l_sc[...] = alpha * l_sc[...] + jnp.sum(
            p, axis=-1, keepdims=True, dtype=jnp.float32)
        v = v_ref[...]                                        # (tk, NH) bf16
        pv = jnp.stack([
            jnp.dot(p[n].astype(v.dtype), head_slice(v, n),
                    preferred_element_type=jnp.float32)
            for n in range(n_heads)])                         # (N, tq, H) f32
        acc_sc[...] = alpha * acc_sc[...] + pv
        m_sc[...] = m_new

    # Block classification relative to the causal diagonal.
    has_data = ki * tk <= qi * tq + (tq - 1)      # some entries at/below diag
    needs_mask = ki * tk + (tk - 1) > qi * tq     # some entries above diag

    @pl.when(jnp.logical_and(has_data, needs_mask))
    def _compute_masked():
        process_block(True)

    @pl.when(jnp.logical_and(has_data, jnp.logical_not(needs_mask)))
    def _compute_unmasked():
        process_block(False)

    @pl.when(ki == pl.num_programs(2) - 1)
    def _finalize():
        # Exact divide: runs once per q tile on (N, tq, H) only.
        z = acc_sc[...] / l_sc[...]                           # (N, tq, H) f32
        # Lane-concat heads -> (tq, N*H): ONE contraction-dense W_O matmul.
        z_flat = jnp.concatenate([z[n] for n in range(n_heads)], axis=-1)
        out = jnp.dot(z_flat.astype(wo_ref.dtype), wo_ref[...],
                      preferred_element_type=jnp.float32)     # (tq, E)
        o_ref[...] = (out + bo_ref[...]).astype(o_ref.dtype)


# --------------------------------------------------------------------------- #
# Wrapper
# --------------------------------------------------------------------------- #
def _choose_tile(total, target):
    """Largest multiple-of-8 divisor of `total` that is <= target.
    Falls back to `total` (block == full dim, always layout-valid); for very
    large awkward `total` this can cost VMEM — pad S upstream in that case."""
    if total <= target:
        return total
    for cand in range(target, 7, -8):
        if total % cand == 0:
            return cand
    return total


def attention_forward(x, W_Q, W_K, W_V, W_O, b_Q, b_K, b_V, b_O,
                      *, seq_tile=256, q_tile=256, kv_tile=128,
                      exp_dtype=jnp.bfloat16):
    """x: (B, S, E) f32.  W_Q/K/V: (N, E, H); W_O: (N, H, E); b_Q/K/V: (N, H);
    b_O: (E,).  Returns (B, S, E) f32.
    Tile defaults suit v7x's 64 MiB VMEM; on v5e/v6e (128 MiB) q_tile can be
    raised to 384-512 to cut K/V re-reads.  Use exp_dtype=jnp.float32 on v5e
    (no bf16 EUP)."""
    B, S, E = x.shape
    N, _, H = W_Q.shape
    NH = N * H
    f32, bf16 = jnp.float32, jnp.bfloat16

    # ---- host-side weight prep (layout plumbing + scale folding) ---------- #
    scale = 1.0 / (H ** 0.5)                      # fold 1/sqrt(d_head) into Q proj
    wq = jnp.transpose(W_Q.astype(f32) * scale, (1, 0, 2)).reshape(E, NH).astype(bf16)
    wk = jnp.transpose(W_K.astype(f32), (1, 0, 2)).reshape(E, NH).astype(bf16)
    wv = jnp.transpose(W_V.astype(f32), (1, 0, 2)).reshape(E, NH).astype(bf16)
    wo = W_O.astype(f32).reshape(NH, E).astype(bf16)          # head-major rows
    bq = (b_Q.astype(f32) * scale).reshape(1, NH)
    bk = b_K.astype(f32).reshape(1, NH)
    bv = b_V.astype(f32).reshape(1, NH)
    bo = b_O.astype(f32).reshape(1, E)
    x_bf = x.astype(bf16)

    ts = _choose_tile(S, seq_tile)
    tq = _choose_tile(S, q_tile)
    tk = _choose_tile(S, kv_tile)

    # ---- kernel 1: fused Q/K/V projection (lane-dense outputs) ------------ #
    # Weight/bias index maps are constant -> Pallas fetches them once.
    w_spec = pl.BlockSpec((E, NH), lambda b, si: (0, 0))
    b_spec = pl.BlockSpec((1, NH), lambda b, si: (0, 0))
    qkv_out_spec = pl.BlockSpec((None, ts, NH), lambda b, si: (b, si, 0))

    q, k, v = pl.pallas_call(
        _qkv_proj_kernel,
        out_shape=tuple(jax.ShapeDtypeStruct((B, S, NH), bf16) for _ in range(3)),
        grid_spec=pltpu.PrefetchScalarGridSpec(
            num_scalar_prefetch=0,
            grid=(B, S // ts),
            in_specs=[
                pl.BlockSpec((None, ts, E), lambda b, si: (b, si, 0)),
                w_spec, w_spec, w_spec,
                b_spec, b_spec, b_spec,
            ],
            out_specs=[qkv_out_spec, qkv_out_spec, qkv_out_spec],
        ),
        compiler_params=pltpu.CompilerParams(
            dimension_semantics=("parallel", "parallel"),
            vmem_limit_bytes=64 * 1024 * 1024),
    )(x_bf, wq, wk, wv, bq, bk, bv)

    # ---- kernel 2: flash attention + fused output projection -------------- #
    # Clamp the K/V block index at the causal diagonal: above-diagonal blocks
    # repeat the previous index, so Pallas skips their DMA entirely.
    def kv_index(b, qi, ki):
        return (b, jnp.minimum(ki, (qi * tq + tq - 1) // tk), 0)

    kernel2 = functools.partial(_flash_attn_kernel,
                                n_heads=N, d_head=H, exp_dtype=exp_dtype)

    out = pl.pallas_call(
        kernel2,
        out_shape=jax.ShapeDtypeStruct((B, S, E), f32),
        grid_spec=pltpu.PrefetchScalarGridSpec(
            num_scalar_prefetch=0,
            grid=(B, S // tq, S // tk),
            in_specs=[
                pl.BlockSpec((None, tq, NH), lambda b, qi, ki: (b, qi, 0)),
                pl.BlockSpec((None, tk, NH), kv_index),
                pl.BlockSpec((None, tk, NH), kv_index),
                pl.BlockSpec((NH, E), lambda b, qi, ki: (0, 0)),
                pl.BlockSpec((1, E), lambda b, qi, ki: (0, 0)),
            ],
            out_specs=pl.BlockSpec((None, tq, E), lambda b, qi, ki: (b, qi, 0)),
            scratch_shapes=[
                pltpu.VMEM((N, tq, 1), f32),   # running max m
                pltpu.VMEM((N, tq, 1), f32),   # running sum l
                pltpu.VMEM((N, tq, H), f32),   # output accumulator
            ],
        ),
        compiler_params=pltpu.CompilerParams(
            dimension_semantics=("parallel", "parallel", "arbitrary"),
            vmem_limit_bytes=64 * 1024 * 1024),
    )(q, k, v, wo, bo)
    return out


# --------------------------------------------------------------------------- #
# Pure-JAX reference (mirrors the PyTorch forward exactly, f32)
# --------------------------------------------------------------------------- #
def attention_reference(x, W_Q, W_K, W_V, W_O, b_Q, b_K, b_V, b_O):
    d_head = W_Q.shape[-1]
    keys = jnp.einsum('neh,bse->bsnh', W_K, x) + b_K
    queries = jnp.einsum('neh,bse->bsnh', W_Q, x) + b_Q
    val = jnp.einsum('neh,bse->bsnh', W_V, x) + b_V
    dot_prod = jnp.einsum('bknh,bqnh->bnqk', keys, queries) / (d_head ** 0.5)
    S = x.shape[1]
    mask = jnp.tril(jnp.ones((S, S), jnp.float32))
    masked = dot_prod - 1.0e9 * (1.0 - mask)
    attn = jax.nn.softmax(masked, axis=-1)
    z = jnp.einsum('bknh,bnqk->bqnh', val, attn)
    return jnp.einsum('bqnh,nhe->bqe', z, W_O) + b_O


if __name__ == "__main__":
    # Small config consistent with the module's structure.
    batch, seq = 2, 8
    d_model, n_heads, d_head = 32, 4, 8
    init_range = 0.02

    key = jax.random.PRNGKey(0)
    kx, kq, kk, kv, ko, kbq, kbk, kbv, kbo = jax.random.split(key, 9)

    x = jax.random.normal(kx, (batch, seq, d_model), dtype=jnp.float32)
    W_Q = init_range * jax.random.normal(kq, (n_heads, d_model, d_head), dtype=jnp.float32)
    W_K = init_range * jax.random.normal(kk, (n_heads, d_model, d_head), dtype=jnp.float32)
    W_V = init_range * jax.random.normal(kv, (n_heads, d_model, d_head), dtype=jnp.float32)
    W_O = init_range * jax.random.normal(ko, (n_heads, d_head, d_model), dtype=jnp.float32)
    # Biases are zero-initialized in the module but are learnable parameters;
    # use small nonzero values here to exercise the bias paths.
    b_Q = init_range * jax.random.normal(kbq, (n_heads, d_head), dtype=jnp.float32)
    b_K = init_range * jax.random.normal(kbk, (n_heads, d_head), dtype=jnp.float32)
    b_V = init_range * jax.random.normal(kbv, (n_heads, d_head), dtype=jnp.float32)
    b_O = init_range * jax.random.normal(kbo, (d_model,), dtype=jnp.float32)

    out = attention_forward(x, W_Q, W_K, W_V, W_O, b_Q, b_K, b_V, b_O)
    out = jax.block_until_ready(out)

    ref = attention_reference(x, W_Q, W_K, W_V, W_O, b_Q, b_K, b_V, b_O)
    assert out.shape == (batch, seq, d_model)
    # bf16 matmul inputs and bf16 exp of the probabilities (f32 accumulation)
    # => loosen tolerance vs the f32 reference.
    assert jnp.allclose(out, ref, atol=2e-3, rtol=2e-2), "mismatch vs reference"

    print("KERNEL_OK")
</pallas_src>

<mosaic_0001>
module attributes {stable_mosaic.version = 11 : i64} {
  func.func @_qkv_proj_kernel(%arg0: i32, %arg1: i32, %arg2: memref<1x8x32xbf16, #tpu.memory_space<vmem>>, %arg3: memref<32x32xbf16, #tpu.memory_space<vmem>>, %arg4: memref<32x32xbf16, #tpu.memory_space<vmem>>, %arg5: memref<32x32xbf16, #tpu.memory_space<vmem>>, %arg6: memref<1x32xf32, #tpu.memory_space<vmem>>, %arg7: memref<1x32xf32, #tpu.memory_space<vmem>>, %arg8: memref<1x32xf32, #tpu.memory_space<vmem>>, %arg9: memref<1x8x32xbf16, #tpu.memory_space<vmem>>, %arg10: memref<1x8x32xbf16, #tpu.memory_space<vmem>>, %arg11: memref<1x8x32xbf16, #tpu.memory_space<vmem>>) attributes {dimension_semantics = [#tpu.dimension_semantics<parallel>, #tpu.dimension_semantics<parallel>], iteration_bounds = array<i64: 2, 1>, scalar_prefetch = 0 : i64, scratch_operands = 0 : i64, tpu.core_type = #tpu.core_type<tc>, window_params = [{transform_indices = @transform_0, window_bounds = array<i64: 1, 8, 32>}, {pipeline_mode = #tpu.pipeline_mode<synchronous>, transform_indices = @transform_1, window_bounds = array<i64: 32, 32>}, {pipeline_mode = #tpu.pipeline_mode<synchronous>, transform_indices = @transform_2, window_bounds = array<i64: 32, 32>}, {pipeline_mode = #tpu.pipeline_mode<synchronous>, transform_indices = @transform_3, window_bounds = array<i64: 32, 32>}, {pipeline_mode = #tpu.pipeline_mode<synchronous>, transform_indices = @transform_4, window_bounds = array<i64: 1, 32>}, {pipeline_mode = #tpu.pipeline_mode<synchronous>, transform_indices = @transform_5, window_bounds = array<i64: 1, 32>}, {pipeline_mode = #tpu.pipeline_mode<synchronous>, transform_indices = @transform_6, window_bounds = array<i64: 1, 32>}, {transform_indices = @transform_7, window_bounds = array<i64: 1, 8, 32>}, {transform_indices = @transform_8, window_bounds = array<i64: 1, 8, 32>}, {transform_indices = @transform_9, window_bounds = array<i64: 1, 8, 32>}]} {
    %c0 = arith.constant 0 : index
    %c0_0 = arith.constant 0 : index
    %c0_1 = arith.constant 0 : index
    %0 = vector.load %arg2[%c0, %c0_0, %c0_1] : memref<1x8x32xbf16, #tpu.memory_space<vmem>>, vector<1x8x32xbf16>
    %1 = vector.shape_cast %0 : vector<1x8x32xbf16> to vector<8x32xbf16>
    %c0_2 = arith.constant 0 : index
    %c0_3 = arith.constant 0 : index
    %2 = vector.load %arg3[%c0_2, %c0_3] : memref<32x32xbf16, #tpu.memory_space<vmem>>, vector<32x32xbf16>
    %cst = arith.constant dense<0.000000e+00> : vector<8x32xf32>
    %3 = tpu.matmul %1, %2, %cst {dimension_numbers = #tpu.dot_dimension_numbers<[1], [0], [0], [1], [0, 0, 1, 1], [], []>} : vector<8x32xbf16>, vector<32x32xbf16>, vector<8x32xf32> -> vector<8x32xf32>
    %c0_4 = arith.constant 0 : index
    %c0_5 = arith.constant 0 : index
    %4 = vector.load %arg6[%c0_4, %c0_5] : memref<1x32xf32, #tpu.memory_space<vmem>>, vector<1x32xf32>
    %5 = vector.broadcast %4 : vector<1x32xf32> to vector<8x32xf32>
    %6 = arith.addf %3, %5 : vector<8x32xf32>
    %7 = arith.truncf %6 : vector<8x32xf32> to vector<8x32xbf16>
    %c0_6 = arith.constant 0 : index
    %c0_7 = arith.constant 0 : index
    %c0_8 = arith.constant 0 : index
    %8 = vector.load %arg9[%c0_6, %c0_7, %c0_8] : memref<1x8x32xbf16, #tpu.memory_space<vmem>>, vector<1x8x32xbf16>
    %9 = vector.shape_cast %8 : vector<1x8x32xbf16> to vector<8x32xbf16>
    %10 = vector.shape_cast %7 : vector<8x32xbf16> to vector<1x8x32xbf16>
    tpu.vector_store %arg9[%c0_6, %c0_7, %c0_8], %10 {strides = array<i32>} : memref<1x8x32xbf16, #tpu.memory_space<vmem>>, vector<1x8x32xbf16>,
    %c0_9 = arith.constant 0 : index
    %c0_10 = arith.constant 0 : index
    %11 = vector.load %arg4[%c0_9, %c0_10] : memref<32x32xbf16, #tpu.memory_space<vmem>>, vector<32x32xbf16>
    %cst_11 = arith.constant dense<0.000000e+00> : vector<8x32xf32>
    %12 = tpu.matmul %1, %11, %cst_11 {dimension_numbers = #tpu.dot_dimension_numbers<[1], [0], [0], [1], [0, 0, 1, 1], [], []>} : vector<8x32xbf16>, vector<32x32xbf16>, vector<8x32xf32> -> vector<8x32xf32>
    %c0_12 = arith.constant 0 : index
    %c0_13 = arith.constant 0 : index
    %13 = vector.load %arg7[%c0_12, %c0_13] : memref<1x32xf32, #tpu.memory_space<vmem>>, vector<1x32xf32>
    %14 = vector.broadcast %13 : vector<1x32xf32> to vector<8x32xf32>
    %15 = arith.addf %12, %14 : vector<8x32xf32>
    %16 = arith.truncf %15 : vector<8x32xf32> to vector<8x32xbf16>
    %c0_14 = arith.constant 0 : index
    %c0_15 = arith.constant 0 : index
    %c0_16 = arith.constant 0 : index
    %17 = vector.load %arg10[%c0_14, %c0_15, %c0_16] : memref<1x8x32xbf16, #tpu.memory_space<vmem>>, vector<1x8x32xbf16>
    %18 = vector.shape_cast %17 : vector<1x8x32xbf16> to vector<8x32xbf16>
    %19 = vector.shape_cast %16 : vector<8x32xbf16> to vector<1x8x32xbf16>
    tpu.vector_store %arg10[%c0_14, %c0_15, %c0_16], %19 {strides = array<i32>} : memref<1x8x32xbf16, #tpu.memory_space<vmem>>, vector<1x8x32xbf16>,
    %c0_17 = arith.constant 0 : index
    %c0_18 = arith.constant 0 : index
    %20 = vector.load %arg5[%c0_17, %c0_18] : memref<32x32xbf16, #tpu.memory_space<vmem>>, vector<32x32xbf16>
    %cst_19 = arith.constant dense<0.000000e+00> : vector<8x32xf32>
    %21 = tpu.matmul %1, %20, %cst_19 {dimension_numbers = #tpu.dot_dimension_numbers<[1], [0], [0], [1], [0, 0, 1, 1], [], []>} : vector<8x32xbf16>, vector<32x32xbf16>, vector<8x32xf32> -> vector<8x32xf32>
    %c0_20 = arith.constant 0 : index
    %c0_21 = arith.constant 0 : index
    %22 = vector.load %arg8[%c0_20, %c0_21] : memref<1x32xf32, #tpu.memory_space<vmem>>, vector<1x32xf32>
    %23 = vector.broadcast %22 : vector<1x32xf32> to vector<8x32xf32>
    %24 = arith.addf %21, %23 : vector<8x32xf32>
    %25 = arith.truncf %24 : vector<8x32xf32> to vector<8x32xbf16>
    %c0_22 = arith.constant 0 : index
    %c0_23 = arith.constant 0 : index
    %c0_24 = arith.constant 0 : index
    %26 = vector.load %arg11[%c0_22, %c0_23, %c0_24] : memref<1x8x32xbf16, #tpu.memory_space<vmem>>, vector<1x8x32xbf16>
    %27 = vector.shape_cast %26 : vector<1x8x32xbf16> to vector<8x32xbf16>
    %28 = vector.shape_cast %25 : vector<8x32xbf16> to vector<1x8x32xbf16>
    tpu.vector_store %arg11[%c0_22, %c0_23, %c0_24], %28 {strides = array<i32>} : memref<1x8x32xbf16, #tpu.memory_space<vmem>>, vector<1x8x32xbf16>,
    return
  }
  func.func @transform_0(%arg0: i32, %arg1: i32) -> (i32, i32, i32) {
    %c0_i32 = arith.constant 0 : i32
    %c0_i32_0 = arith.constant 0 : i32
    return %arg0, %arg1, %c0_i32 : i32, i32, i32
  }
  func.func @transform_1(%arg0: i32, %arg1: i32) -> (i32, i32) {
    %c0_i32 = arith.constant 0 : i32
    %c0_i32_0 = arith.constant 0 : i32
    %c0_i32_1 = arith.constant 0 : i32
    return %c0_i32, %c0_i32_0 : i32, i32
  }
  func.func @transform_2(%arg0: i32, %arg1: i32) -> (i32, i32) {
    %c0_i32 = arith.constant 0 : i32
    %c0_i32_0 = arith.constant 0 : i32
    %c0_i32_1 = arith.constant 0 : i32
    return %c0_i32, %c0_i32_0 : i32, i32
  }
  func.func @transform_3(%arg0: i32, %arg1: i32) -> (i32, i32) {
    %c0_i32 = arith.constant 0 : i32
    %c0_i32_0 = arith.constant 0 : i32
    %c0_i32_1 = arith.constant 0 : i32
    return %c0_i32, %c0_i32_0 : i32, i32
  }
  func.func @transform_4(%arg0: i32, %arg1: i32) -> (i32, i32) {
    %c0_i32 = arith.constant 0 : i32
    %c0_i32_0 = arith.constant 0 : i32
    %c0_i32_1 = arith.constant 0 : i32
    return %c0_i32, %c0_i32_0 : i32, i32
  }
  func.func @transform_5(%arg0: i32, %arg1: i32) -> (i32, i32) {
    %c0_i32 = arith.constant 0 : i32
    %c0_i32_0 = arith.constant 0 : i32
    %c0_i32_1 = arith.constant 0 : i32
    return %c0_i32, %c0_i32_0 : i32, i32
  }
  func.func @transform_6(%arg0: i32, %arg1: i32) -> (i32, i32) {
    %c0_i32 = arith.constant 0 : i32
    %c0_i32_0 = arith.constant 0 : i32
    %c0_i32_1 = arith.constant 0 : i32
    return %c0_i32, %c0_i32_0 : i32, i32
  }
  func.func @transform_7(%arg0: i32, %arg1: i32) -> (i32, i32, i32) {
    %c0_i32 = arith.constant 0 : i32
    %c0_i32_0 = arith.constant 0 : i32
    return %arg0, %arg1, %c0_i32 : i32, i32, i32
  }
  func.func @transform_8(%arg0: i32, %arg1: i32) -> (i32, i32, i32) {
    %c0_i32 = arith.constant 0 : i32
    %c0_i32_0 = arith.constant 0 : i32
    return %arg0, %arg1, %c0_i32 : i32, i32, i32
  }
  func.func @transform_9(%arg0: i32, %arg1: i32) -> (i32, i32, i32) {
    %c0_i32 = arith.constant 0 : i32
    %c0_i32_0 = arith.constant 0 : i32
    return %arg0, %arg1, %c0_i32 : i32, i32, i32
  }
}

</mosaic_0001>

<llo_original>
// kernel: tpu_custom_call.1
$region0: #{tpu_custom_call.1}
  #allocation0 [shape = 'u32[]', space=smem, size = 0x4, offset = 0x4, fixed_abs, tag = 'smem constant byte address 0x4 - core index']
  #allocation1 [shape = 'u32[144,128]{1,0:T(1,128)}', space=vmem, size = 0x12000, scoped, tag = 'internal scratch']
  %s0 = inlined_call_operand.hbm [shape: bf16[2,8,32], index: 0, kind: input, shape index: {}]
  %s1 = inlined_call_operand.hbm [shape: bf16[32,32], index: 1, kind: input, shape index: {}]
  %s2 = inlined_call_operand.hbm [shape: bf16[32,32], index: 2, kind: input, shape index: {}]
  %s3 = inlined_call_operand.hbm [shape: bf16[32,32], index: 3, kind: input, shape index: {}]
  %s4 = inlined_call_operand.hbm [shape: f32[1,32], index: 4, kind: input, shape index: {}]
  %s5 = inlined_call_operand.hbm [shape: f32[1,32], index: 5, kind: input, shape index: {}]
  %s6 = inlined_call_operand.hbm [shape: f32[1,32], index: 6, kind: input, shape index: {}]
  %s7 = inlined_call_operand.hbm [shape: bf16[2,8,32], index: 7, kind: output, shape index: {0}]
  %s8 = inlined_call_operand.hbm [shape: bf16[2,8,32], index: 8, kind: output, shape index: {1}]
  %s9 = inlined_call_operand.hbm [shape: bf16[2,8,32], index: 9, kind: output, shape index: {2}]
  %10 = xla_tuple %s7, %s8, %s9
  %s11 = sld [smem:[#allocation0]]
  $region105: #{tpu_custom_call.1} parent=0
    _
  %s13 = ssub.s32 1, %s11
  %s14 = scalar_select 0, %s13, %s11
  $region1: #{tpu_custom_call.1} parent=0
    #allocation2 [shape = 'u8[4096]{0}', space=vmem, size = 0x1000, scoped, tag = 'input window, operand 0']
    #allocation3 [shape = 's32[2]{0}', space=sflag, size = 0x8, scoped, tag = 'scoped memory for tpu_custom_call.1']
    #allocation4 [shape = 's32[2]{0}', space=sflag, size = 0x8, scoped, tag = 'scoped memory for tpu_custom_call.1']
    #allocation5 [shape = 'u8[8192]{0}', space=vmem, size = 0x2000, scoped, tag = 'input window, operand 1, single buffered']
    #allocation6 [shape = 's32[1]{0}', space=sflag, size = 0x4, scoped, tag = 'scoped memory for tpu_custom_call.1']
    #allocation7 [shape = 'u8[8192]{0}', space=vmem, size = 0x2000, scoped, tag = 'input window, operand 2, single buffered']
    #allocation8 [shape = 'u8[8192]{0}', space=vmem, size = 0x2000, scoped, tag = 'input window, operand 3, single buffered']
    #allocation9 [shape = 's32[1]{0}', space=sflag, size = 0x4, scoped, tag = 'scoped memory for tpu_custom_call.1']
    #allocation10 [shape = 'u8[512]{0}', space=vmem, size = 0x400, scoped, tag = 'input window, operand 4, single buffered']
    #allocation11 [shape = 'u8[512]{0}', space=vmem, size = 0x400, scoped, tag = 'input window, operand 5, single buffered']
    #allocation12 [shape = 's32[1]{0}', space=sflag, size = 0x4, scoped, tag = 'scoped memory for tpu_custom_call.1']
    #allocation13 [shape = 'u8[512]{0}', space=vmem, size = 0x400, scoped, tag = 'input window, operand 6, single buffered']
    #allocation14 [shape = 'u8[4096]{0}', space=vmem, size = 0x1000, scoped, tag = 'output window, operand 0']
    #allocation15 [shape = 'u8[4096]{0}', space=vmem, size = 0x1000, scoped, tag = 'output window, operand 1']
    #allocation16 [shape = 's32[2]{0}', space=sflag, size = 0x8, scoped, tag = 'scoped memory for tpu_custom_call.1']
    #allocation17 [shape = 'u8[4096]{0}', space=vmem, size = 0x1000, scoped, tag = 'output window, operand 2']
    %15 = vsyncpa [#allocation3], 0
    %s16 = scalar_lea.sflag [#allocation3], 1
    %17 = vsyncpa %s16, 0
    %18 = vsyncpa [#allocation6], 0
    %19 = vsyncpa [#allocation9], 0
    %20 = vsyncpa [#allocation12], 0
    %21 = vsyncpa [#allocation4], 0
    %s22 = scalar_lea.sflag [#allocation4], 1
    %23 = vsyncpa %s22, 0
    %24 = vsyncpa [#allocation16], 0
    %s25 = scalar_lea.sflag [#allocation16], 1
    %26 = vsyncpa %s25, 0
    loop: start=0, step=1, limit=4
    $region2: #{tpu_custom_call.1} parent=1 // loop_pre_header
      _
    $region3: #{tpu_custom_call.1} parent=1 // loop_header
      %s28 = sphi 0, %s32
      %p29 = scmp.ge.s32.totalorder %s28, 4
      %s35 = sphi 0, %s47
      %s36 = sphi 0, %s43
      %s37 = sphi 0, %s35
      %s38 = sphi 0, %s36
      %s39 = sphi 0, %s37
      %s40 = sphi 0, %s38
      %s52 = sphi 0, %s54
      %s55 = sphi 0, %s52
      %s56 = sphi 0, %s55
      %s72 = sphi 0, %s56
      %s76 = sphi 0, %s76
      %s78 = sphi 0, %s76
      %s79 = sphi 0, %s78
      %s93 = sphi 0, %s79
      %s97 = sphi 0, %s97
      %s99 = sphi 0, %s97
      %s100 = sphi 0, %s99
      %s114 = sphi 0, %s100
      %s118 = sphi 0, %s118
      %s120 = sphi 0, %s118
      %s121 = sphi 0, %s120
      %s135 = sphi 0, %s121
      %s139 = sphi 0, %s139
      %s141 = sphi 0, %s139
      %s142 = sphi 0, %s141
      %s156 = sphi 0, %s142
      %s160 = sphi 0, %s160
      %s162 = sphi 0, %s160
      %s163 = sphi 0, %s162
      %s177 = sphi 0, %s163
      %s181 = sphi 0, %s181
      %s183 = sphi 0, %s181
      %s184 = sphi 0, %s183
      %s198 = sphi 0, %s184
      %s206 = sphi 0, %s208
      %s209 = sphi 0, %s206
      %s210 = sphi 0, %s209
      %s226 = sphi 0, %s210
      %s234 = sphi 0, %s236
      %s237 = sphi 0, %s234
      %s238 = sphi 0, %s237
      %s254 = sphi 0, %s238
      %s262 = sphi 0, %s264
      %s265 = sphi 0, %s262
      %s266 = sphi 0, %s265
      %s282 = sphi 0, %s266
    $region4: #{tpu_custom_call.1} parent=1 // loop_header_branch
      %31 = sbr.rel (%p29) target = $region8
    $region5: #{tpu_custom_call.1} parent=1 // loop_body
      %s33 = ssub.s32 %s28, 1
      %s34 = ssub.s32 %s28, 2
      %s41 = sadd.s32 1, %s36
      %p42 = scmp.ge.s32.totalorder %s41, 1
      %s43 = scalar_select %p42, 0, %s41
      %s44 = sadd.s32 1, %s35
      %s45 = scalar_select %p42, %s44, %s35
      %p46 = scmp.ge.s32.totalorder %s45, 2
      %s47 = scalar_select %p46, 0, %s45
      %s48 = ssub.s32 %s35, %s47
      %s49 = ssub.s32 %s36, %s43
      %s50 = sor.u32 %s48, %s49
      %p51 = scmp.eq.s32.totalorder %s50, 0
      %s53 = sadd.s32 %s52, 1
      %s54 = scalar_select %p51, %s52, %s53
      %p57 = pneg %p51
      %p58 = scmp.eq.s32.totalorder %s28, 1
      %p59 = por %p57, %p58
      %p60 = scmp.ne.s32.totalorder %s52, %s55
      %p61 = scmp.eq.s32.totalorder %s28, 0
      %p62 = por %p60, %p61
      %p63 = scmp.ne.s32.totalorder %s52, %s55
      %p64 = scmp.eq.s32.totalorder %s33, 1
      %p65 = por %p63, %p64
      %p66 = scmp.ne.s32.totalorder %s55, %s56
      %p67 = scmp.eq.s32.totalorder %s33, 0
      %p68 = por %p66, %p67
      %p69 = scmp.ne.s32.totalorder %s55, %s56
      %p70 = scmp.eq.s32.totalorder %s34, 1
      %p71 = por %p69, %p70
      %p73 = scmp.ne.s32.totalorder %s56, %s72
      %p74 = scmp.eq.s32.totalorder %s34, 0
      %p75 = por %p73, %p74
      %s77 = sadd.s32 %s76, 1
      %p80 = scmp.eq.s32.totalorder %s28, 1
      %p81 = scmp.ne.s32.totalorder %s76, %s78
      %p82 = scmp.eq.s32.totalorder %s28, 0
      %p83 = por %p81, %p82
      %p84 = scmp.ne.s32.totalorder %s76, %s78
      %p85 = scmp.eq.s32.totalorder %s33, 1
      %p86 = por %p84, %p85
      %p87 = scmp.ne.s32.totalorder %s78, %s79
      %p88 = scmp.eq.s32.totalorder %s33, 0
      %p89 = por %p87, %p88
      %p90 = scmp.ne.s32.totalorder %s78, %s79
      %p91 = scmp.eq.s32.totalorder %s34, 1
      %p92 = por %p90, %p91
      %p94 = scmp.ne.s32.totalorder %s79, %s93
      %p95 = scmp.eq.s32.totalorder %s34, 0
      %p96 = por %p94, %p95
      %s98 = sadd.s32 %s97, 1
      %p101 = scmp.eq.s32.totalorder %s28, 1
      %p102 = scmp.ne.s32.totalorder %s97, %s99
      %p103 = scmp.eq.s32.totalorder %s28, 0
      %p104 = por %p102, %p103
      %p105 = scmp.ne.s32.totalorder %s97, %s99
      %p106 = scmp.eq.s32.totalorder %s33, 1
      %p107 = por %p105, %p106
      %p108 = scmp.ne.s32.totalorder %s99, %s100
      %p109 = scmp.eq.s32.totalorder %s33, 0
      %p110 = por %p108, %p109
      %p111 = scmp.ne.s32.totalorder %s99, %s100
      %p112 = scmp.eq.s32.totalorder %s34, 1
      %p113 = por %p111, %p112
      %p115 = scmp.ne.s32.totalorder %s100, %s114
      %p116 = scmp.eq.s32.totalorder %s34, 0
      %p117 = por %p115, %p116
      %s119 = sadd.s32 %s118, 1
      %p122 = scmp.eq.s32.totalorder %s28, 1
      %p123 = scmp.ne.s32.totalorder %s118, %s120
      %p124 = scmp.eq.s32.totalorder %s28, 0
      %p125 = por %p123, %p124
      %p126 = scmp.ne.s32.totalorder %s118, %s120
      %p127 = scmp.eq.s32.totalorder %s33, 1
      %p128 = por %p126, %p127
      %p129 = scmp.ne.s32.totalorder %s120, %s121
      %p130 = scmp.eq.s32.totalorder %s33, 0
      %p131 = por %p129, %p130
      %p132 = scmp.ne.s32.totalorder %s120, %s121
      %p133 = scmp.eq.s32.totalorder %s34, 1
      %p134 = por %p132, %p133
      %p136 = scmp.ne.s32.totalorder %s121, %s135
      %p137 = scmp.eq.s32.totalorder %s34, 0
      %p138 = por %p136, %p137
      %s140 = sadd.s32 %s139, 1
      %p143 = scmp.eq.s32.totalorder %s28, 1
      %p144 = scmp.ne.s32.totalorder %s139, %s141
      %p145 = scmp.eq.s32.totalorder %s28, 0
      %p146 = por %p144, %p145
      %p147 = scmp.ne.s32.totalorder %s139, %s141
      %p148 = scmp.eq.s32.totalorder %s33, 1
      %p149 = por %p147, %p148
      %p150 = scmp.ne.s32.totalorder %s141, %s142
      %p151 = scmp.eq.s32.totalorder %s33, 0
      %p152 = por %p150, %p151
      %p153 = scmp.ne.s32.totalorder %s141, %s142
      %p154 = scmp.eq.s32.totalorder %s34, 1
      %p155 = por %p153, %p154
      %p157 = scmp.ne.s32.totalorder %s142, %s156
      %p158 = scmp.eq.s32.totalorder %s34, 0
      %p159 = por %p157, %p158
      %s161 = sadd.s32 %s160, 1
      %p164 = scmp.eq.s32.totalorder %s28, 1
      %p165 = scmp.ne.s32.totalorder %s160, %s162
      %p166 = scmp.eq.s32.totalorder %s28, 0
      %p167 = por %p165, %p166
      %p168 = scmp.ne.s32.totalorder %s160, %s162
      %p169 = scmp.eq.s32.totalorder %s33, 1
      %p170 = por %p168, %p169
      %p171 = scmp.ne.s32.totalorder %s162, %s163
      %p172 = scmp.eq.s32.totalorder %s33, 0
      %p173 = por %p171, %p172
      %p174 = scmp.ne.s32.totalorder %s162, %s163
      %p175 = scmp.eq.s32.totalorder %s34, 1
      %p176 = por %p174, %p175
      %p178 = scmp.ne.s32.totalorder %s163, %s177
      %p179 = scmp.eq.s32.totalorder %s34, 0
      %p180 = por %p178, %p179
      %s182 = sadd.s32 %s181, 1
      %p185 = scmp.eq.s32.totalorder %s28, 1
      %p186 = scmp.ne.s32.totalorder %s181, %s183
      %p187 = scmp.eq.s32.totalorder %s28, 0
      %p188 = por %p186, %p187
      %p189 = scmp.ne.s32.totalorder %s181, %s183
      %p190 = scmp.eq.s32.totalorder %s33, 1
      %p191 = por %p189, %p190
      %p192 = scmp.ne.s32.totalorder %s183, %s184
      %p193 = scmp.eq.s32.totalorder %s33, 0
      %p194 = por %p192, %p193
      %p195 = scmp.ne.s32.totalorder %s183, %s184
      %p196 = scmp.eq.s32.totalorder %s34, 1
      %p197 = por %p195, %p196
      %p199 = scmp.ne.s32.totalorder %s184, %s198
      %p200 = scmp.eq.s32.totalorder %s34, 0
      %p201 = por %p199, %p200
      %s202 = ssub.s32 %s35, %s47
      %s203 = ssub.s32 %s36, %s43
      %s204 = sor.u32 %s202, %s203
      %p205 = scmp.eq.s32.totalorder %s204, 0
      %s207 = sadd.s32 %s206, 1
      %s208 = scalar_select %p205, %s206, %s207
      %p211 = pneg %p205
      %p212 = scmp.eq.s32.totalorder %s28, 1
      %p213 = por %p211, %p212
      %p214 = scmp.ne.s32.totalorder %s206, %s209
      %p215 = scmp.eq.s32.totalorder %s28, 0
      %p216 = por %p214, %p215
      %p217 = scmp.ne.s32.totalorder %s206, %s209
      %p218 = scmp.eq.s32.totalorder %s33, 1
      %p219 = por %p217, %p218
      %p220 = scmp.ne.s32.totalorder %s209, %s210
      %p221 = scmp.eq.s32.totalorder %s33, 0
      %p222 = por %p220, %p221
      %p223 = scmp.ne.s32.totalorder %s209, %s210
      %p224 = scmp.eq.s32.totalorder %s34, 1
      %p225 = por %p223, %p224
      %p227 = scmp.ne.s32.totalorder %s210, %s226
      %p228 = scmp.eq.s32.totalorder %s34, 0
      %p229 = por %p227, %p228
      %s230 = ssub.s32 %s35, %s47
      %s231 = ssub.s32 %s36, %s43
      %s232 = sor.u32 %s230, %s231
      %p233 = scmp.eq.s32.totalorder %s232, 0
      %s235 = sadd.s32 %s234, 1
      %s236 = scalar_select %p233, %s234, %s235
      %p239 = pneg %p233
      %p240 = scmp.eq.s32.totalorder %s28, 1
      %p241 = por %p239, %p240
      %p242 = scmp.ne.s32.totalorder %s234, %s237
      %p243 = scmp.eq.s32.totalorder %s28, 0
      %p244 = por %p242, %p243
      %p245 = scmp.ne.s32.totalorder %s234, %s237
      %p246 = scmp.eq.s32.totalorder %s33, 1
      %p247 = por %p245, %p246
      %p248 = scmp.ne.s32.totalorder %s237, %s238
      %p249 = scmp.eq.s32.totalorder %s33, 0
      %p250 = por %p248, %p249
      %p251 = scmp.ne.s32.totalorder %s237, %s238
      %p252 = scmp.eq.s32.totalorder %s34, 1
      %p253 = por %p251, %p252
      %p255 = scmp.ne.s32.totalorder %s238, %s254
      %p256 = scmp.eq.s32.totalorder %s34, 0
      %p257 = por %p255, %p256
      %s258 = ssub.s32 %s35, %s47
      %s259 = ssub.s32 %s36, %s43
      %s260 = sor.u32 %s258, %s259
      %p261 = scmp.eq.s32.totalorder %s260, 0
      %s263 = sadd.s32 %s262, 1
      %s264 = scalar_select %p261, %s262, %s263
      %p267 = pneg %p261
      %p268 = scmp.eq.s32.totalorder %s28, 1
      %p269 = por %p267, %p268
      %p270 = scmp.ne.s32.totalorder %s262, %s265
      %p271 = scmp.eq.s32.totalorder %s28, 0
      %p272 = por %p270, %p271
      %p273 = scmp.ne.s32.totalorder %s262, %s265
      %p274 = scmp.eq.s32.totalorder %s33, 1
      %p275 = por %p273, %p274
      %p276 = scmp.ne.s32.totalorder %s265, %s266
      %p277 = scmp.eq.s32.totalorder %s33, 0
      %p278 = por %p276, %p277
      %p279 = scmp.ne.s32.totalorder %s265, %s266
      %p280 = scmp.eq.s32.totalorder %s34, 1
      %p281 = por %p279, %p280
      %p283 = scmp.ne.s32.totalorder %s266, %s282
      %p284 = scmp.eq.s32.totalorder %s34, 0
      %p285 = por %p283, %p284
      %p286 = scmp.le.s32.totalorder 1, %s28
      %p287 = scmp.lt.s32.totalorder %s28, 3
      %p288 = pnand %p286, %p287
      %p289 = pneg %p288
      // Predicated region
      $region9: #{tpu_custom_call.1} parent=5 // pred_check
        _
      $region10: #{tpu_custom_call.1} parent=5 // pred_check_branch
        %291 = sbr.rel (%p288) target = $region12
      $region11: #{tpu_custom_call.1} parent=5 // pred_region
        %s292 = ssub.s32 %s28, 1
        // Predicated region
        $region13: #{tpu_custom_call.1} parent=11 // pred_check
          %p293 = pneg %p89
        $region14: #{tpu_custom_call.1} parent=11 // pred_check_branch
          %295 = sbr.rel (%p293) target = $region16
        $region15: #{tpu_custom_call.1} parent=11 // pred_region
          %s297 = ssub.s32 256, 256
          %298 = vsyncadd [#allocation6], %s297
          %s299 = sshll.u32 [#allocation5], 4
          %s300 = int_to_ptr.vmem [resolvable:$true] %s299
          %305 = dma.hbm_to_vmem [thread:$0]  %s1, 256, %s300, [#allocation6], 64, 64, 4
        $region16: #{tpu_custom_call.1} parent=11 // pred_fallthru
          _
        // Predicated region
        $region17: #{tpu_custom_call.1} parent=11 // pred_check
          %p306 = pneg %p110
        $region18: #{tpu_custom_call.1} parent=11 // pred_check_branch
          %308 = sbr.rel (%p306) target = $region20
        $region19: #{tpu_custom_call.1} parent=11 // pred_region
          %s310 = ssub.s32 256, 256
          %311 = vsyncadd [#allocation6], %s310
          %s312 = sshll.u32 [#allocation7], 4
          %s313 = int_to_ptr.vmem [resolvable:$true] %s312
          %318 = dma.hbm_to_vmem [thread:$0]  %s2, 256, %s313, [#allocation6], 64, 64, 4
        $region20: #{tpu_custom_call.1} parent=11 // pred_fallthru
          _
        // Predicated region
        $region21: #{tpu_custom_call.1} parent=11 // pred_check
          %p319 = pneg %p131
        $region22: #{tpu_custom_call.1} parent=11 // pred_check_branch
          %321 = sbr.rel (%p319) target = $region24
        $region23: #{tpu_custom_call.1} parent=11 // pred_region
          %s323 = ssub.s32 256, 256
          %324 = vsyncadd [#allocation9], %s323
          %s325 = sshll.u32 [#allocation8], 4
          %s326 = int_to_ptr.vmem [resolvable:$true] %s325
          %331 = dma.hbm_to_vmem [thread:$0]  %s3, 256, %s326, [#allocation9], 64, 64, 4
        $region24: #{tpu_custom_call.1} parent=11 // pred_fallthru
          _
        // Predicated region
        $region25: #{tpu_custom_call.1} parent=11 // pred_check
          %p332 = pneg %p152
        $region26: #{tpu_custom_call.1} parent=11 // pred_check_branch
          %334 = sbr.rel (%p332) target = $region28
        $region27: #{tpu_custom_call.1} parent=11 // pred_region
          %s336 = ssub.s32 16, 16
          %337 = vsyncadd [#allocation9], %s336
          %s339 = sshll.u32 [#allocation10], 4
          %s340 = int_to_ptr.vmem [resolvable:$true] %s339
          %342 = dma.hbm_to_vmem [thread:$0]  %s4, 16, %s340, [#allocation9]
        $region28: #{tpu_custom_call.1} parent=11 // pred_fallthru
          _
        // Predicated region
        $region29: #{tpu_custom_call.1} parent=11 // pred_check
          %p343 = pneg %p173
        $region30: #{tpu_custom_call.1} parent=11 // pred_check_branch
          %345 = sbr.rel (%p343) target = $region32
        $region31: #{tpu_custom_call.1} parent=11 // pred_region
          %s347 = ssub.s32 16, 16
          %348 = vsyncadd [#allocation12], %s347
          %s350 = sshll.u32 [#allocation11], 4
          %s351 = int_to_ptr.vmem [resolvable:$true] %s350
          %353 = dma.hbm_to_vmem [thread:$0]  %s5, 16, %s351, [#allocation12]
        $region32: #{tpu_custom_call.1} parent=11 // pred_fallthru
          _
        // Predicated region
        $region33: #{tpu_custom_call.1} parent=11 // pred_check
          %p354 = pneg %p194
        $region34: #{tpu_custom_call.1} parent=11 // pred_check_branch
          %356 = sbr.rel (%p354) target = $region36
        $region35: #{tpu_custom_call.1} parent=11 // pred_region
          %s358 = ssub.s32 16, 16
          %359 = vsyncadd [#allocation12], %s358
          %s361 = sshll.u32 [#allocation13], 4
          %s362 = int_to_ptr.vmem [resolvable:$true] %s361
          %364 = dma.hbm_to_vmem [thread:$0]  %s6, 16, %s362, [#allocation12]
        $region36: #{tpu_custom_call.1} parent=11 // pred_fallthru
          _
      $region12: #{tpu_custom_call.1} parent=5 // pred_fallthru
        _
      %p365 = scmp.lt.s32.totalorder %s28, 2
      // Predicated region
      $region37: #{tpu_custom_call.1} parent=5 // pred_check
        %p366 = pneg %p365
      $region38: #{tpu_custom_call.1} parent=5 // pred_check_branch
        %368 = sbr.rel (%p366) target = $region40
      $region39: #{tpu_custom_call.1} parent=5 // pred_region
        // Predicated region
        $region41: #{tpu_custom_call.1} parent=39 // pred_check
          %p369 = pneg %p62
        $region42: #{tpu_custom_call.1} parent=39 // pred_check_branch
          %371 = sbr.rel (%p369) target = $region44
        $region43: #{tpu_custom_call.1} parent=39 // pred_region
          %s372 = sand.u32 %s52, 1
          %s373 = scalar_lea.sflag [#allocation3], %s372
          %s374 = sand.u32 %s52, 1
          %s375 = smul.addr %s374, 4
          %s376 = scalar_lea.vmem [#allocation2], %s375
          %s378 = ssub.s32 64, 64
          %379 = vsyncadd %s373, %s378
          %s380 = sadd.s32 %s36, %s35
          %s381 = smul.addr %s380, 64
          %s382 = scalar_lea.hbm %s0, %s381
          %s384 = sshll.u32 %s376, 4
          %s385 = int_to_ptr.vmem [resolvable:$true] %s384
          %387 = dma.hbm_to_vmem [thread:$0]  %s382, 64, %s385, %s373
        $region44: #{tpu_custom_call.1} parent=39 // pred_fallthru
          _
      $region40: #{tpu_custom_call.1} parent=5 // pred_fallthru
        _
      %p388 = scmp.le.s32.totalorder 1, %s28
      %p389 = scmp.lt.s32.totalorder %s28, 3
      %p390 = pnand %p388, %p389
      %p391 = pneg %p390
      // Predicated region
      $region45: #{tpu_custom_call.1} parent=5 // pred_check
        _
      $region46: #{tpu_custom_call.1} parent=5 // pred_check_branch
        %393 = sbr.rel (%p390) target = $region48
      $region47: #{tpu_custom_call.1} parent=5 // pred_region
        %s394 = ssub.s32 %s28, 1
        %s395 = sand.u32 %s55, 1
        %s396 = scalar_lea.sflag [#allocation3], %s395
        %s397 = sand.u32 %s55, 1
        %s398 = smul.addr %s397, 4
        %s399 = scalar_lea.vmem [#allocation2], %s398
        // Predicated region
        $region49: #{tpu_custom_call.1} parent=47 // pred_check
          %p400 = pneg %p68
        $region50: #{tpu_custom_call.1} parent=47 // pred_check_branch
          %402 = sbr.rel (%p400) target = $region52
        $region51: #{tpu_custom_call.1} parent=47 // pred_region
          %403 = dma.done %s396, 64
        $region52: #{tpu_custom_call.1} parent=47 // pred_fallthru
          _
        // Predicated region
        $region53: #{tpu_custom_call.1} parent=47 // pred_check
          %p404 = pneg %p89
        $region54: #{tpu_custom_call.1} parent=47 // pred_check_branch
          %406 = sbr.rel (%p404) target = $region56
        $region55: #{tpu_custom_call.1} parent=47 // pred_region
          %407 = dma.done [#allocation6], 256
        $region56: #{tpu_custom_call.1} parent=47 // pred_fallthru
          _
        // Predicated region
        $region57: #{tpu_custom_call.1} parent=47 // pred_check
          %p408 = pneg %p110
        $region58: #{tpu_custom_call.1} parent=47 // pred_check_branch
          %410 = sbr.rel (%p408) target = $region60
        $region59: #{tpu_custom_call.1} parent=47 // pred_region
          %411 = dma.done [#allocation6], 256
        $region60: #{tpu_custom_call.1} parent=47 // pred_fallthru
          _
        // Predicated region
        $region61: #{tpu_custom_call.1} parent=47 // pred_check
          %p412 = pneg %p131
        $region62: #{tpu_custom_call.1} parent=47 // pred_check_branch
          %414 = sbr.rel (%p412) target = $region64
        $region63: #{tpu_custom_call.1} parent=47 // pred_region
          %415 = dma.done [#allocation9], 256
        $region64: #{tpu_custom_call.1} parent=47 // pred_fallthru
          _
        // Predicated region
        $region65: #{tpu_custom_call.1} parent=47 // pred_check
          %p416 = pneg %p152
        $region66: #{tpu_custom_call.1} parent=47 // pred_check_branch
          %418 = sbr.rel (%p416) target = $region68
        $region67: #{tpu_custom_call.1} parent=47 // pred_region
          %419 = dma.done [#allocation9], 16
        $region68: #{tpu_custom_call.1} parent=47 // pred_fallthru
          _
        // Predicated region
        $region69: #{tpu_custom_call.1} parent=47 // pred_check
          %p420 = pneg %p173
        $region70: #{tpu_custom_call.1} parent=47 // pred_check_branch
          %422 = sbr.rel (%p420) target = $region72
        $region71: #{tpu_custom_call.1} parent=47 // pred_region
          %423 = dma.done [#allocation12], 16
        $region72: #{tpu_custom_call.1} parent=47 // pred_fallthru
          _
        // Predicated region
        $region73: #{tpu_custom_call.1} parent=47 // pred_check
          %p424 = pneg %p194
        $region74: #{tpu_custom_call.1} parent=47 // pred_check_branch
          %426 = sbr.rel (%p424) target = $region76
        $region75: #{tpu_custom_call.1} parent=47 // pred_region
          %427 = dma.done [#allocation12], 16
        $region76: #{tpu_custom_call.1} parent=47 // pred_fallthru
          _
        %s428 = sand.u32 %s55, 1
        %s429 = scalar_lea.sflag [#allocation3], %s428
        %s430 = sand.u32 %s55, 1
        %s431 = smul.addr %s430, 4
        %s432 = scalar_lea.vmem [#allocation2], %s431
        %p433 = pneg %p68
        %p434 = pneg %p65
        %p435 = pneg %p89
        %p436 = pneg %p86
        %p437 = pneg %p110
        %p438 = pneg %p107
        %p439 = pneg %p131
        %p440 = pneg %p128
        %p441 = pneg %p152
        %p442 = pneg %p149
        %p443 = pneg %p173
        %p444 = pneg %p170
        %p445 = pneg %p194
        %p446 = pneg %p191
        %p447 = pneg %p222
        %p448 = pneg %p219
        %s449 = sand.u32 %s209, 1
        %s450 = scalar_lea.sflag [#allocation4], %s449
        %s451 = sand.u32 %s209, 1
        %s452 = smul.addr %s451, 4
        %s453 = scalar_lea.vmem [#allocation14], %s452
        %p454 = pneg %p250
        %p455 = pneg %p247
        %s456 = sand.u32 %s33, 1
        %s457 = scalar_lea.sflag [#allocation16], %s456
        %s458 = sand.u32 %s237, 1
        %s459 = smul.addr %s458, 4
        %s460 = scalar_lea.vmem [#allocation15], %s459
        %p461 = pneg %p278
        %p462 = pneg %p275
        %s463 = sand.u32 %s33, 1
        %s464 = scalar_lea.sflag [#allocation16], %s463
        %s465 = sand.u32 %s265, 1
        %s466 = smul.addr %s465, 4
        %s467 = scalar_lea.vmem [#allocation17], %s466
        %v469 = vld [vmem:[%s399] sm:$0xf]
        %v470 = vld [vmem:[#allocation5] sm:$0xf]
        %v471 = vld [vmem:[#allocation5 + $0x4] sm:$0xf]
        %v472 = vld [vmem:[#allocation5 + $0x8] sm:$0xf]
        %v473 = vld [vmem:[#allocation5 + $0xc] sm:$0xf]
        %v474 = vld [vmem:[#allocation10] sm:$0x1]
        %v476 = vlaneseq
        %v477 = vshrl.u32 %v476, 7
        %v478 = vsub.s32 0, %v477
        %v479 = vrot.slane %v474, %v478
        %v485 = vunpack.c.l.b16 %v470
        %v486 = vunpack.c.l.b16 %v471
        %v487 = vunpack.c.l.b16 %v472
        %v488 = vunpack.c.l.b16 %v473
        %v489 = vpack.c.b16 %v486, %v485
        %v490 = vpack.c.b16 %v488, %v487
        %vm493 = vcmask 261120
        %v495 = vsel %vm493, %v469, 0
        %497 = vmatprep.subr.bf16.mxu0 0
        %498 = vmatpush1.bf16.msra.mxu0 %v489
        %499 = vmatprep.subr.bf16.mxu0 0
        %500 = vmatpush1.bf16.msra.mxu0 %v490
        %501 = vmatprep.subr.bf16.mxu0 0
        %502 = vmatpush1.bf16.msra.mxu0 0
        %503 = vmatprep.subr.bf16.mxu0 0
        %504 = vmatpush1.bf16.msra.mxu0 0
        %505 = vmatprep.subr.bf16.mxu0 0
        %506 = vmatpush1.bf16.msra.mxu0 0
        %507 = vmatprep.subr.bf16.mxu0 0
        %508 = vmatpush1.bf16.msra.mxu0 0
        %509 = vmatprep.subr.bf16.mxu0 0
        %510 = vmatpush1.bf16.msra.mxu0 0
        %511 = vmatprep.subr.bf16.mxu0 0
        %512 = vmatpush1.bf16.msra.mxu0 0
        %513 = vmatprep.subr.bf16.mxu0 0
        %514 = vmatpush1.bf16.msra.mxu0 0
        %515 = vmatprep.subr.bf16.mxu0 0
        %516 = vmatpush1.bf16.msra.mxu0 0
        %517 = vmatprep.subr.bf16.mxu0 0
        %518 = vmatpush1.bf16.msra.mxu0 0
        %519 = vmatprep.subr.bf16.mxu0 0
        %520 = vmatpush1.bf16.msra.mxu0 0
        %521 = vmatprep.subr.bf16.mxu0 0
        %522 = vmatpush1.bf16.msra.mxu0 0
        %523 = vmatprep.subr.bf16.mxu0 0
        %524 = vmatpush1.bf16.msra.mxu0 0
        %525 = vmatprep.subr.bf16.mxu0 0
        %526 = vmatpush1.bf16.msra.mxu0 0
        %527 = vmatprep.subr.bf16.mxu0 0
        %528 = vmatpush1.bf16.msra.mxu0 0
        %529 = vmatprep.mubr.bf16.mxu0 0
        %530 = vmatmul.mubr.bf16.gmra.mrb[0].mxu0 %v495
        %v531 = vpop.f32.mrb[0].mxu0
        %v532 = vadd.f32 %v479, %v531
        %v533 = vpop.f32.mrb[0].mxu0
        %v534 = vpop.f32.mrb[0].mxu0
        %v535 = vpop.f32.mrb[0].mxu0
        %536 = vdwg.mxu0
        %v537 = vpack.c.bf16 %v532, %v532
        %vm538 = vcmask 257024
        %539 = vst.msk [vmem:[%s453] sm:$0xf] %vm538, %v537
        %v540 = vld [vmem:[#allocation7] sm:$0xf]
        %v541 = vld [vmem:[#allocation7 + $0x4] sm:$0xf]
        %v542 = vld [vmem:[#allocation7 + $0x8] sm:$0xf]
        %v543 = vld [vmem:[#allocation7 + $0xc] sm:$0xf]
        %v544 = vld [vmem:[#allocation11] sm:$0x1]
        %v546 = vlaneseq
        %v547 = vshrl.u32 %v546, 7
        %v548 = vsub.s32 0, %v547
        %v549 = vrot.slane %v544, %v548
        %v555 = vunpack.c.l.b16 %v540
        %v556 = vunpack.c.l.b16 %v541
        %v557 = vunpack.c.l.b16 %v542
        %v558 = vunpack.c.l.b16 %v543
        %v559 = vpack.c.b16 %v556, %v555
        %v560 = vpack.c.b16 %v558, %v557
        %563 = vmatprep.subr.bf16.mxu0 0
        %564 = vmatpush1.bf16.msra.mxu0 %v559
        %565 = vmatprep.subr.bf16.mxu0 0
        %566 = vmatpush1.bf16.msra.mxu0 %v560
        %567 = vmatprep.subr.bf16.mxu0 0
        %568 = vmatpush1.bf16.msra.mxu0 0
        %569 = vmatprep.subr.bf16.mxu0 0
        %570 = vmatpush1.bf16.msra.mxu0 0
        %571 = vmatprep.subr.bf16.mxu0 0
        %572 = vmatpush1.bf16.msra.mxu0 0
        %573 = vmatprep.subr.bf16.mxu0 0
        %574 = vmatpush1.bf16.msra.mxu0 0
        %575 = vmatprep.subr.bf16.mxu0 0
        %576 = vmatpush1.bf16.msra.mxu0 0
        %577 = vmatprep.subr.bf16.mxu0 0
        %578 = vmatpush1.bf16.msra.mxu0 0
        %579 = vmatprep.subr.bf16.mxu0 0
        %580 = vmatpush1.bf16.msra.mxu0 0
        %581 = vmatprep.subr.bf16.mxu0 0
        %582 = vmatpush1.bf16.msra.mxu0 0
        %583 = vmatprep.subr.bf16.mxu0 0
        %584 = vmatpush1.bf16.msra.mxu0 0
        %585 = vmatprep.subr.bf16.mxu0 0
        %586 = vmatpush1.bf16.msra.mxu0 0
        %587 = vmatprep.subr.bf16.mxu0 0
        %588 = vmatpush1.bf16.msra.mxu0 0
        %589 = vmatprep.subr.bf16.mxu0 0
        %590 = vmatpush1.bf16.msra.mxu0 0
        %591 = vmatprep.subr.bf16.mxu0 0
        %592 = vmatpush1.bf16.msra.mxu0 0
        %593 = vmatprep.subr.bf16.mxu0 0
        %594 = vmatpush1.bf16.msra.mxu0 0
        %595 = vmatprep.mubr.bf16.mxu0 0
        %596 = vmatmul.mubr.bf16.gmra.mrb[0].mxu0 %v495
        %v597 = vpop.f32.mrb[0].mxu0
        %v598 = vadd.f32 %v549, %v597
        %v599 = vpop.f32.mrb[0].mxu0
        %v600 = vpop.f32.mrb[0].mxu0
        %v601 = vpop.f32.mrb[0].mxu0
        %602 = vdwg.mxu0
        %v603 = vpack.c.bf16 %v598, %v598
        %604 = vst.msk [vmem:[%s460] sm:$0xf] %vm538, %v603
        %v605 = vld [vmem:[#allocation8] sm:$0xf]
        %v606 = vld [vmem:[#allocation8 + $0x4] sm:$0xf]
        %v607 = vld [vmem:[#allocation8 + $0x8] sm:$0xf]
        %v608 = vld [vmem:[#allocation8 + $0xc] sm:$0xf]
        %v609 = vld [vmem:[#allocation13] sm:$0x1]
        %v611 = vlaneseq
        %v612 = vshrl.u32 %v611, 7
        %v613 = vsub.s32 0, %v612
        %v614 = vrot.slane %v609, %v613
        %v620 = vunpack.c.l.b16 %v605
        %v621 = vunpack.c.l.b16 %v606
        %v622 = vunpack.c.l.b16 %v607
        %v623 = vunpack.c.l.b16 %v608
        %v624 = vpack.c.b16 %v621, %v620
        %v625 = vpack.c.b16 %v623, %v622
        %628 = vmatprep.subr.bf16.mxu0 0
        %629 = vmatpush1.bf16.msra.mxu0 %v624
        %630 = vmatprep.subr.bf16.mxu0 0
        %631 = vmatpush1.bf16.msra.mxu0 %v625
        %632 = vmatprep.subr.bf16.mxu0 0
        %633 = vmatpush1.bf16.msra.mxu0 0
        %634 = vmatprep.subr.bf16.mxu0 0
        %635 = vmatpush1.bf16.msra.mxu0 0
        %636 = vmatprep.subr.bf16.mxu0 0
        %637 = vmatpush1.bf16.msra.mxu0 0
        %638 = vmatprep.subr.bf16.mxu0 0
        %639 = vmatpush1.bf16.msra.mxu0 0
        %640 = vmatprep.subr.bf16.mxu0 0
        %641 = vmatpush1.bf16.msra.mxu0 0
        %642 = vmatprep.subr.bf16.mxu0 0
        %643 = vmatpush1.bf16.msra.mxu0 0
        %644 = vmatprep.subr.bf16.mxu0 0
        %645 = vmatpush1.bf16.msra.mxu0 0
        %646 = vmatprep.subr.bf16.mxu0 0
        %647 = vmatpush1.bf16.msra.mxu0 0
        %648 = vmatprep.subr.bf16.mxu0 0
        %649 = vmatpush1.bf16.msra.mxu0 0
        %650 = vmatprep.subr.bf16.mxu0 0
        %651 = vmatpush1.bf16.msra.mxu0 0
        %652 = vmatprep.subr.bf16.mxu0 0
        %653 = vmatpush1.bf16.msra.mxu0 0
        %654 = vmatprep.subr.bf16.mxu0 0
        %655 = vmatpush1.bf16.msra.mxu0 0
        %656 = vmatprep.subr.bf16.mxu0 0
        %657 = vmatpush1.bf16.msra.mxu0 0
        %658 = vmatprep.subr.bf16.mxu0 0
        %659 = vmatpush1.bf16.msra.mxu0 0
        %660 = vmatprep.mubr.bf16.mxu0 0
        %661 = vmatmul.mubr.bf16.gmra.mrb[0].mxu0 %v495
        %v662 = vpop.f32.mrb[0].mxu0
        %v663 = vadd.f32 %v614, %v662
        %v664 = vpop.f32.mrb[0].mxu0
        %v665 = vpop.f32.mrb[0].mxu0
        %v666 = vpop.f32.mrb[0].mxu0
        %667 = vdwg.mxu0
        %v668 = vpack.c.bf16 %v663, %v663
        %669 = vst.msk [vmem:[%s467] sm:$0xf] %vm538, %v668
        %s670 = sand.u32 %s209, 1
        %s671 = scalar_lea.sflag [#allocation4], %s670
        %s672 = sand.u32 %s209, 1
        %s673 = smul.addr %s672, 4
        %s674 = scalar_lea.vmem [#allocation14], %s673
        %s675 = sand.u32 %s33, 1
        %s676 = scalar_lea.sflag [#allocation16], %s675
        %s677 = sand.u32 %s237, 1
        %s678 = smul.addr %s677, 4
        %s679 = scalar_lea.vmem [#allocation15], %s678
        %s680 = sand.u32 %s33, 1
        %s681 = scalar_lea.sflag [#allocation16], %s680
        %s682 = sand.u32 %s265, 1
        %s683 = smul.addr %s682, 4
        %s684 = scalar_lea.vmem [#allocation17], %s683
        // Predicated region
        $region77: #{tpu_custom_call.1} parent=47 // pred_check
          %p685 = pneg %p219
        $region78: #{tpu_custom_call.1} parent=47 // pred_check_branch
          %687 = sbr.rel (%p685) target = $region80
        $region79: #{tpu_custom_call.1} parent=47 // pred_region
          %s689 = ssub.s32 64, 64
          %690 = vsyncadd %s671, %s689
          %s691 = sadd.s32 %s38, %s37
          %s692 = smul.addr %s691, 64
          %s693 = scalar_lea.hbm %s7, %s692
          %s695 = sshll.u32 %s674, 4
          %s696 = int_to_ptr.vmem [resolvable:$true] %s695
          %698 = dma.vmem_to_hbm [thread:$0]  %s696, 64, %s693, %s671
        $region80: #{tpu_custom_call.1} parent=47 // pred_fallthru
          _
        // Predicated region
        $region81: #{tpu_custom_call.1} parent=47 // pred_check
          %p699 = pneg %p247
        $region82: #{tpu_custom_call.1} parent=47 // pred_check_branch
          %701 = sbr.rel (%p699) target = $region84
        $region83: #{tpu_custom_call.1} parent=47 // pred_region
          %s703 = ssub.s32 64, 64
          %704 = vsyncadd %s676, %s703
          %s705 = sadd.s32 %s38, %s37
          %s706 = smul.addr %s705, 64
          %s707 = scalar_lea.hbm %s8, %s706
          %s709 = sshll.u32 %s679, 4
          %s710 = int_to_ptr.vmem [resolvable:$true] %s709
          %712 = dma.vmem_to_hbm [thread:$0]  %s710, 64, %s707, %s676
        $region84: #{tpu_custom_call.1} parent=47 // pred_fallthru
          _
        // Predicated region
        $region85: #{tpu_custom_call.1} parent=47 // pred_check
          %p713 = pneg %p275
        $region86: #{tpu_custom_call.1} parent=47 // pred_check_branch
          %715 = sbr.rel (%p713) target = $region88
        $region87: #{tpu_custom_call.1} parent=47 // pred_region
          %s717 = ssub.s32 64, 64
          %718 = vsyncadd %s681, %s717
          %s719 = sadd.s32 %s38, %s37
          %s720 = smul.addr %s719, 64
          %s721 = scalar_lea.hbm %s9, %s720
          %s723 = sshll.u32 %s684, 4
          %s724 = int_to_ptr.vmem [resolvable:$true] %s723
          %726 = dma.vmem_to_hbm [thread:$0]  %s724, 64, %s721, %s681
        $region88: #{tpu_custom_call.1} parent=47 // pred_fallthru
          _
      $region48: #{tpu_custom_call.1} parent=5 // pred_fallthru
        _
      %p727 = scmp.le.s32.totalorder 2, %s28
      // Predicated region
      $region89: #{tpu_custom_call.1} parent=5 // pred_check
        %p728 = pneg %p727
      $region90: #{tpu_custom_call.1} parent=5 // pred_check_branch
        %730 = sbr.rel (%p728) target = $region92
      $region91: #{tpu_custom_call.1} parent=5 // pred_region
        %s731 = ssub.s32 %s28, 2
        // Predicated region
        $region93: #{tpu_custom_call.1} parent=91 // pred_check
          %p732 = pneg %p225
        $region94: #{tpu_custom_call.1} parent=91 // pred_check_branch
          %734 = sbr.rel (%p732) target = $region96
        $region95: #{tpu_custom_call.1} parent=91 // pred_region
          %s735 = sand.u32 %s210, 1
          %s736 = scalar_lea.sflag [#allocation4], %s735
          %s737 = sand.u32 %s210, 1
          %s738 = smul.addr %s737, 4
          %s739 = scalar_lea.vmem [#allocation14], %s738
          %740 = dma.done %s736, 64
        $region96: #{tpu_custom_call.1} parent=91 // pred_fallthru
          _
        // Predicated region
        $region97: #{tpu_custom_call.1} parent=91 // pred_check
          %p741 = pneg %p253
        $region98: #{tpu_custom_call.1} parent=91 // pred_check_branch
          %743 = sbr.rel (%p741) target = $region100
        $region99: #{tpu_custom_call.1} parent=91 // pred_region
          %s744 = sand.u32 %s34, 1
          %s745 = scalar_lea.sflag [#allocation16], %s744
          %s746 = sand.u32 %s238, 1
          %s747 = smul.addr %s746, 4
          %s748 = scalar_lea.vmem [#allocation15], %s747
          %749 = dma.done %s745, 64
        $region100: #{tpu_custom_call.1} parent=91 // pred_fallthru
          _
        // Predicated region
        $region101: #{tpu_custom_call.1} parent=91 // pred_check
          %p750 = pneg %p281
        $region102: #{tpu_custom_call.1} parent=91 // pred_check_branch
          %752 = sbr.rel (%p750) target = $region104
        $region103: #{tpu_custom_call.1} parent=91 // pred_region
          %s753 = sand.u32 %s34, 1
          %s754 = scalar_lea.sflag [#allocation16], %s753
          %s755 = sand.u32 %s266, 1
          %s756 = smul.addr %s755, 4
          %s757 = scalar_lea.vmem [#allocation17], %s756
          %758 = dma.done %s754, 64
        $region104: #{tpu_custom_call.1} parent=91 // pred_fallthru
          _
      $region92: #{tpu_custom_call.1} parent=5 // pred_fallthru
        _
    $region6: #{tpu_custom_call.1} parent=1 // loop_footer
      %s32 = sadd.s32 1, %s28
    $region7: #{tpu_custom_call.1} parent=1 // loop_footer_branch
      %27 = sbr.rel target = $region3
    $region8: #{tpu_custom_call.1} parent=1 // loop_exit
      _
    %759 = vsyncpa [#allocation3], 1
    %s760 = scalar_lea.sflag [#allocation3], 1
    %761 = vsyncpa %s760, 1
    %762 = vsyncpa [#allocation6], 1
    %763 = vsyncpa [#allocation9], 1
    %764 = vsyncpa [#allocation12], 1
    %765 = vsyncpa [#allocation4], 1
    %s766 = scalar_lea.sflag [#allocation4], 1
    %767 = vsyncpa %s766, 1
    %768 = vsyncpa [#allocation16], 1
    %s769 = scalar_lea.sflag [#allocation16], 1
    %770 = vsyncpa %s769, 1

</llo_original>
